<compile_context>
chip_gen: v7x
topology: tpu7x:2x2x1
jax: 0.10.0
libtpu: 0.0.40
codegen_flags: <defaults>
</compile_context>

<pallas_src>
from functools import partial

import numpy as np
import jax
import jax.numpy as jnp
from jax.experimental import pallas as pl
from jax.experimental.pallas import tpu as pltpu


# ---------------------------------------------------------------------------
# One-time probe: pin down pltpu.roll's rotation convention on this device
# (jnp.roll-like: out[i] = x[(i - shift) % n], or the opposite).
# ---------------------------------------------------------------------------
_ROLL_LIKE_JNP = None


def _roll_matches_jnp():
    global _ROLL_LIKE_JNP
    if _ROLL_LIKE_JNP is None:
        def probe_kernel(x_ref, o_ref):
            o_ref[...] = pltpu.roll(x_ref[...], shift=1, axis=1)

        x = jax.lax.broadcasted_iota(jnp.float32, (8, 128), 1)  # x[s, l] = l
        y = pl.pallas_call(
            probe_kernel,
            out_shape=jax.ShapeDtypeStruct((8, 128), jnp.float32),
        )(x)
        v = float(y[0, 0])
        assert v in (127.0, 1.0), v
        _ROLL_LIKE_JNP = (v == 127.0)
    return _ROLL_LIKE_JNP


# ---------------------------------------------------------------------------
# Pallas kernel
# ---------------------------------------------------------------------------
def _im2col_rolled(v, masks, H, W, roll_like_jnp):
    """Build the 3x3 im2col slab of `v` without leaving registers/VMEM.

    v:     (C, H*W) float32, spatial flattened row-major (h*W + w) on lanes.
    masks: (9, H*W) float32, 1.0 where tap (dy, dx) stays inside the image.
    Returns (9*C, H*W); row (k*C + c), k = (dy+1)*3 + (dx+1), holds
    v[c, (h+dy)*W + (w+dx)] (0 outside the image) for output pixel (h, w).
    Shifts are XLU lane rotations of the flattened spatial axis + a mask.
    """
    C, HW = v.shape
    pieces = []
    k = 0
    for dy in (-1, 0, 1):
        for dx in (-1, 0, 1):
            sh = dy * W + dx                       # flat source offset
            if sh == 0:
                pieces.append(v)                   # centre tap: no shift/mask
            else:
                amt = ((-sh) if roll_like_jnp else sh) % HW
                rolled = pltpu.roll(v, shift=amt, axis=1)
                pieces.append(rolled * masks[k:k + 1, :])
            k += 1
    return jnp.concatenate(pieces, axis=0)         # (9*C, H*W)


def _resblock_kernel(*refs, H, W, has_down, matmul_dtype, roll_like_jnp):
    """Fused ResBlock on one batch element.

    refs = (x, masks, w1, b1, w2, b2, [wd, bd], out)
      x:     (1, Cin, H*W)        w1/wd: (Cout, 9*Cin)   w2: (Cout, 9*Cout)
      masks: (9, H*W)             b*:    (Cout, 1)       out: (1, Cout, H*W)
    """
    if has_down:
        (x_ref, m_ref, w1_ref, b1_ref, w2_ref, b2_ref,
         wd_ref, bd_ref, o_ref) = refs
    else:
        x_ref, m_ref, w1_ref, b1_ref, w2_ref, b2_ref, o_ref = refs
        wd_ref = bd_ref = None

    def mm(w_ref, col):                            # one K = 9*C MXU matmul
        w = w_ref[...]
        if matmul_dtype is not None:
            w, col = w.astype(matmul_dtype), col.astype(matmul_dtype)
        return jnp.dot(w, col, preferred_element_type=jnp.float32)

    x = x_ref[0].astype(jnp.float32)               # (Cin, H*W), lane-dense
    masks = m_ref[...]                             # (9, H*W)

    col_x = _im2col_rolled(x, masks, H, W, roll_like_jnp)   # (9*Cin, H*W)
    # relu(0) == 0  =>  im2col(relu(x)) == relu(im2col(x)):  the same slab
    # feeds conv1 (relu'd input) and the downsample conv (raw input).
    r = mm(w1_ref, jnp.maximum(col_x, 0.0)) + b1_ref[...]            # conv1
    r = jnp.maximum(r, 0.0)
    r = mm(w2_ref, _im2col_rolled(r, masks, H, W, roll_like_jnp)) \
        + b2_ref[...]                                                # conv2

    shortcut = (mm(wd_ref, col_x) + bd_ref[...]) if has_down else x
    o_ref[0] = (shortcut + r).astype(o_ref.dtype)  # lane-dense (Cout, H*W)


# ---------------------------------------------------------------------------
# Wrapper
# ---------------------------------------------------------------------------
def _tap_masks(H, W):
    """(9, H*W) 0/1 masks: tap k=(dy+1)*3+(dx+1) valid where (h+dy, w+dx) is
    inside the image (built once on the host)."""
    m = np.zeros((9, H, W), np.float32)
    k = 0
    for dy in (-1, 0, 1):
        for dx in (-1, 0, 1):
            m[k, max(0, -dy):min(H, H - dy), max(0, -dx):min(W, W - dx)] = 1.0
            k += 1
    return jnp.asarray(m.reshape(9, H * W))


def _pack_weight(w):
    """(3, 3, Cin, Cout) HWIO -> (Cout, 9*Cin); column (ky*3+kx)*Cin + c
    matches the im2col row ordering."""
    cout = w.shape[-1]
    return jnp.transpose(w, (3, 0, 1, 2)).reshape(cout, -1)


def resblock_forward(x_nchw, params, *, matmul_dtype=None):
    """ResBlock forward.  x_nchw: (N, Cin, H, W) -> (N, Cout, H, W).

    matmul_dtype=jnp.bfloat16 casts MXU operands to bf16 (f32 accumulation)
    for v6e / v7x; the default keeps full f32.
    """
    N, Cin, H, W = x_nchw.shape
    Cout = params["w1"].shape[-1]
    has_down = "wd" in params
    HW = H * W
    roll_like_jnp = _roll_matches_jnp()

    # Contiguous NCHW -> (N, C, H*W) is a free reshape; it puts the spatial
    # axis on the TPU lane axis for every load / matmul / store.
    x_flat = x_nchw.reshape(N, Cin, HW)
    args = [x_flat, _tap_masks(H, W),
            _pack_weight(params["w1"]), params["b1"].reshape(Cout, 1),
            _pack_weight(params["w2"]), params["b2"].reshape(Cout, 1)]
    in_specs = [
        pl.BlockSpec((1, Cin, HW), lambda n: (n, 0, 0)),
        pl.BlockSpec((9, HW), lambda n: (0, 0)),
        pl.BlockSpec((Cout, 9 * Cin), lambda n: (0, 0)),
        pl.BlockSpec((Cout, 1), lambda n: (0, 0)),
        pl.BlockSpec((Cout, 9 * Cout), lambda n: (0, 0)),
        pl.BlockSpec((Cout, 1), lambda n: (0, 0)),
    ]
    if has_down:
        args += [_pack_weight(params["wd"]), params["bd"].reshape(Cout, 1)]
        in_specs += [pl.BlockSpec((Cout, 9 * Cin), lambda n: (0, 0)),
                     pl.BlockSpec((Cout, 1), lambda n: (0, 0))]

    flops = 2 * N * HW * 9 * Cin * Cout + 2 * N * HW * 9 * Cout * Cout
    if has_down:
        flops += 2 * N * HW * 9 * Cin * Cout
    bytes_accessed = int(
        (N * Cin * HW + N * Cout * HW) * x_nchw.dtype.itemsize
        + sum(int(np.prod(a.shape)) * a.dtype.itemsize for a in args[1:]))

    out = pl.pallas_call(
        partial(_resblock_kernel, H=H, W=W, has_down=has_down,
                matmul_dtype=matmul_dtype, roll_like_jnp=roll_like_jnp),
        out_shape=jax.ShapeDtypeStruct((N, Cout, HW), x_nchw.dtype),
        grid=(N,),
        in_specs=in_specs,
        out_specs=pl.BlockSpec((1, Cout, HW), lambda n: (n, 0, 0)),
        compiler_params=pltpu.CompilerParams(
            dimension_semantics=("parallel",)),
        cost_estimate=pl.CostEstimate(
            flops=flops, transcendentals=0, bytes_accessed=bytes_accessed),
    )(*args)
    return out.reshape(N, Cout, H, W)


# ---------------------------------------------------------------------------
# Parameters + pure-JAX reference
# ---------------------------------------------------------------------------
def init_resblock_params(key, indim, outdim=None):
    if outdim is None:
        outdim = indim

    def conv_init(k, cin, cout):
        kw, kb = jax.random.split(k)
        w = jax.random.normal(kw, (3, 3, cin, cout), jnp.float32) / np.sqrt(9 * cin)
        b = 0.01 * jax.random.normal(kb, (cout,), jnp.float32)
        return w, b

    k1, k2, k3 = jax.random.split(key, 3)
    p = {}
    p["w1"], p["b1"] = conv_init(k1, indim, outdim)
    p["w2"], p["b2"] = conv_init(k2, outdim, outdim)
    if indim != outdim:
        p["wd"], p["bd"] = conv_init(k3, indim, outdim)   # downsample conv
    return p


def resblock_ref(x, params):
    """Pure-JAX reference of the same forward (lax conv, NCHW)."""
    def conv(v, w, b):
        y = jax.lax.conv_general_dilated(
            v, w, window_strides=(1, 1), padding=((1, 1), (1, 1)),
            dimension_numbers=("NCHW", "HWIO", "NCHW"))
        return y + b.reshape(1, -1, 1, 1)

    r = conv(jnp.maximum(x, 0.0), params["w1"], params["b1"])
    r = conv(jnp.maximum(r, 0.0), params["w2"], params["b2"])
    if "wd" in params:
        x = conv(x, params["wd"], params["bd"])
    return x + r


# ---------------------------------------------------------------------------
if __name__ == "__main__":
    key = jax.random.PRNGKey(0)
    kx1, kx2, kp1, kp2 = jax.random.split(key, 4)

    # Case 1: indim != outdim -> downsample conv on the shortcut.
    N, indim, outdim, H, W = 2, 8, 4, 16, 16
    x1 = jax.random.normal(kx1, (N, indim, H, W), jnp.float32)
    p1 = init_resblock_params(kp1, indim, outdim)
    out1 = jax.block_until_ready(resblock_forward(x1, p1))
    assert out1.shape == (N, outdim, H, W), out1.shape
    np.testing.assert_allclose(np.asarray(out1),
                               np.asarray(resblock_ref(x1, p1)),
                               rtol=2e-4, atol=2e-4)

    # Case 2: indim == outdim -> identity shortcut.
    x2 = jax.random.normal(kx2, (N, outdim, H, W), jnp.float32)
    p2 = init_resblock_params(kp2, outdim, outdim)
    out2 = jax.block_until_ready(resblock_forward(x2, p2))
    assert out2.shape == (N, outdim, H, W), out2.shape
    np.testing.assert_allclose(np.asarray(out2),
                               np.asarray(resblock_ref(x2, p2)),
                               rtol=2e-4, atol=2e-4)

    # Optional bf16 MXU path (v6e/v7x): check it compiles, runs, stays finite.
    out_bf16 = jax.block_until_ready(
        resblock_forward(x1, p1, matmul_dtype=jnp.bfloat16))
    assert out_bf16.shape == (N, outdim, H, W)
    assert bool(jnp.all(jnp.isfinite(out_bf16)))

    print("KERNEL_OK")
</pallas_src>

<mosaic_0001>
module attributes {stable_mosaic.version = 11 : i64} {
  func.func @probe_kernel(%arg0: memref<8x128xf32, #tpu.memory_space<vmem>>, %arg1: memref<8x128xf32, #tpu.memory_space<vmem>>) attributes {dimension_semantics = [], scalar_prefetch = 0 : i64, scratch_operands = 0 : i64, tpu.core_type = #tpu.core_type<tc>} {
    %c0 = arith.constant 0 : index
    %c0_0 = arith.constant 0 : index
    %0 = vector.load %arg0[%c0, %c0_0] : memref<8x128xf32, #tpu.memory_space<vmem>>, vector<8x128xf32>
    %c1_i32 = arith.constant 1 : i32
    %1 = tpu.dynamic_rotate %0 by %c1_i32 dim 1 : vector<8x128xf32>, i32 -> vector<8x128xf32>
    %c0_1 = arith.constant 0 : index
    %c0_2 = arith.constant 0 : index
    %2 = vector.load %arg1[%c0_1, %c0_2] : memref<8x128xf32, #tpu.memory_space<vmem>>, vector<8x128xf32>
    tpu.vector_store %arg1[%c0_1, %c0_2], %1 {strides = array<i32>} : memref<8x128xf32, #tpu.memory_space<vmem>>, vector<8x128xf32>,
    return
  }
}

</mosaic_0001>

<llo_original>
// kernel: tpu_custom_call.1
$region0: #{tpu_custom_call.1}
  #allocation0 [shape = 'u32[]', space=smem, size = 0x4, offset = 0x4, fixed_abs, tag = 'smem constant byte address 0x4 - core index']
  #allocation1 [shape = 'u32[144,128]{1,0:T(1,128)}', space=vmem, size = 0x12000, scoped, tag = 'internal scratch']
  %s0 = inlined_call_operand.hbm [shape: f32[8,128], index: 0, kind: input, shape index: {}]
  %s1 = inlined_call_operand.hbm [shape: f32[8,128], index: 1, kind: output, shape index: {}]
  %s2 = sld [smem:[#allocation0]]
  $region18: #{tpu_custom_call.1} parent=0
    _
  %s4 = ssub.s32 1, %s2
  %s5 = scalar_select 0, %s4, %s2
  $region1: #{tpu_custom_call.1} parent=0
    #allocation2 [shape = 'u8[4096]{0}', space=vmem, size = 0x1000, scoped, tag = 'input window, operand 0, single buffered']
    #allocation3 [shape = 's32[1]{0}', space=sflag, size = 0x4, scoped, tag = 'scoped memory for tpu_custom_call.1']
    #allocation4 [shape = 's32[1]{0}', space=sflag, size = 0x4, scoped, tag = 'scoped memory for tpu_custom_call.1']
    #allocation5 [shape = 'u8[4096]{0}', space=vmem, size = 0x1000, scoped, tag = 'output window, operand 0, single buffered']
    %6 = vsyncpa [#allocation3], 0
    %7 = vsyncpa [#allocation4], 0
    // Predicated region
    $region2: #{tpu_custom_call.1} parent=1 // pred_check
      _
    $region3: #{tpu_custom_call.1} parent=1 // pred_check_branch
      %9 = sbr.rel (0) target = $region5
    $region4: #{tpu_custom_call.1} parent=1 // pred_region
      %s11 = ssub.s32 128, 128
      %12 = vsyncadd [#allocation3], %s11
      %s14 = sshll.u32 [#allocation2], 4
      %s15 = int_to_ptr.vmem [resolvable:$true] %s14
      %17 = dma.hbm_to_vmem [thread:$0]  %s0, 128, %s15, [#allocation3]
    $region5: #{tpu_custom_call.1} parent=1 // pred_fallthru
      _
    // Predicated region
    $region6: #{tpu_custom_call.1} parent=1 // pred_check
      _
    $region7: #{tpu_custom_call.1} parent=1 // pred_check_branch
      %19 = sbr.rel (0) target = $region9
    $region8: #{tpu_custom_call.1} parent=1 // pred_region
      %20 = dma.done [#allocation3], 128
    $region9: #{tpu_custom_call.1} parent=1 // pred_fallthru
      _
    %v21 = vld [vmem:[#allocation2] sm:$0xff]
    %22 = vrot.lane.b32.xlu0 %v21, 1
    %v23 = vpop.permute.xlu0 %22
    %24 = vst [vmem:[#allocation5] sm:$0xff] %v23
    // Predicated region
    $region10: #{tpu_custom_call.1} parent=1 // pred_check
      _
    $region11: #{tpu_custom_call.1} parent=1 // pred_check_branch
      %26 = sbr.rel (0) target = $region13
    $region12: #{tpu_custom_call.1} parent=1 // pred_region
      %s28 = ssub.s32 128, 128
      %29 = vsyncadd [#allocation4], %s28
      %s31 = sshll.u32 [#allocation5], 4
      %s32 = int_to_ptr.vmem [resolvable:$true] %s31
      %34 = dma.vmem_to_hbm [thread:$0]  %s32, 128, %s1, [#allocation4]
    $region13: #{tpu_custom_call.1} parent=1 // pred_fallthru
      _
    // Predicated region
    $region14: #{tpu_custom_call.1} parent=1 // pred_check
      _
    $region15: #{tpu_custom_call.1} parent=1 // pred_check_branch
      %36 = sbr.rel (0) target = $region17
    $region16: #{tpu_custom_call.1} parent=1 // pred_region
      %37 = dma.done [#allocation4], 128
    $region17: #{tpu_custom_call.1} parent=1 // pred_fallthru
      _
    %38 = vsyncpa [#allocation3], 1
    %39 = vsyncpa [#allocation4], 1

</llo_original>
